<compile_context>
chip_gen: v6e
topology: v6e:2x2x1
jax: 0.10.0
libtpu: 0.0.40
codegen_flags: <defaults>
</compile_context>

<pallas_src>
import functools

import jax
import jax.numpy as jnp
from jax.experimental import pallas as pl
from jax.experimental.pallas import tpu as pltpu


def _policy_kernel(xt_ref, w1_ref, b1_ref, wh_ref, bh_ref, out_ref):
    x_t = xt_ref[...]                                                  # (S, TB)

    # fc1 + ReLU, transposed: (H, S) @ (S, TB) -> (H, TB)
    h_t = jnp.dot(w1_ref[...], x_t, preferred_element_type=jnp.float32) + b1_ref[...]
    h_t = jnp.maximum(h_t, 0.0)

    # Fused mu/std heads: (2A, H) @ (H, TB) -> (2A, TB)
    z_t = jnp.dot(wh_ref[...], h_t, preferred_element_type=jnp.float32) + bh_ref[...]
    a = z_t.shape[0] // 2

    mu_full = 2.0 * jnp.tanh(z_t)                                      # (2A, TB)
    std_full = jnp.logaddexp(z_t, 0.0)                                 # stable softplus

    row = jax.lax.broadcasted_iota(jnp.int32, z_t.shape, dimension=0)  # sublane index
    out_ref[...] = jnp.where(row < a, mu_full, std_full)               # mu rows || std rows


def _round_up(x, m):
    return (x + m - 1) // m * m


def policy_net_continuous(states, params, *, tb=512):
    """states: (B, state_dim) f32.

    params use the PyTorch (out_features, in_features) layout, with the mu/std
    heads packed along the out axis.  Returns (mu, std), each (B, action_dim).
    """
    B, S = states.shape
    w1, b1 = params["w1"], params["b1"]          # (H, S), (H, 1)
    wh, bh = params["wh"], params["bh"]          # (2A, H), (2A, 1)
    H = w1.shape[0]
    two_a = wh.shape[0]
    A = two_a // 2

    # Batch lives on the 128-wide lane axis: tile it in multiples of 128.
    tb = max(128, min(tb, _round_up(B, 128)))
    bp = _round_up(B, tb)
    grid = (bp // tb,)

    # Transposed, lane-padded input (S, Bp); padded columns are sliced off below.
    x_t = jnp.pad(states.T, ((0, 0), (0, bp - B)))

    vmem = pltpu.MemorySpace.VMEM
    packed = pl.pallas_call(
        _policy_kernel,
        out_shape=jax.ShapeDtypeStruct((two_a, bp), jnp.float32),
        grid=grid,
        in_specs=[
            pl.BlockSpec((S, tb), lambda i: (0, i), memory_space=vmem),       # states tile
            pl.BlockSpec((H, S), lambda i: (0, 0), memory_space=vmem),        # resident
            pl.BlockSpec((H, 1), lambda i: (0, 0), memory_space=vmem),        # resident
            pl.BlockSpec((two_a, H), lambda i: (0, 0), memory_space=vmem),    # resident
            pl.BlockSpec((two_a, 1), lambda i: (0, 0), memory_space=vmem),    # resident
        ],
        out_specs=pl.BlockSpec((two_a, tb), lambda i: (0, i), memory_space=vmem),
        compiler_params=pltpu.CompilerParams(dimension_semantics=("parallel",)),
    )(x_t, w1, b1, wh, bh)

    mu = packed[:A, :B].T        # free slices / transpose in the wrapper
    std = packed[A:, :B].T
    return mu, std


def init_params(key, state_dim, hidden_dim, action_dim):
    """Deterministic synthetic init (torch.nn.Linear-style uniform ranges).

    Weights are kept in PyTorch (out, in) layout; the two head linears are
    packed once along the out axis into (2A, H) / (2A, 1).
    """
    ks = jax.random.split(key, 6)

    def linear(kw, kb, fan_in, fan_out):
        bound = 1.0 / jnp.sqrt(jnp.float32(fan_in))
        w = jax.random.uniform(kw, (fan_out, fan_in), jnp.float32, -bound, bound)
        b = jax.random.uniform(kb, (fan_out, 1), jnp.float32, -bound, bound)
        return w, b

    w1, b1 = linear(ks[0], ks[1], state_dim, hidden_dim)
    wmu, bmu = linear(ks[2], ks[3], hidden_dim, action_dim)
    wstd, bstd = linear(ks[4], ks[5], hidden_dim, action_dim)

    wh = jnp.concatenate([wmu, wstd], axis=0)    # (2A, H)
    bh = jnp.concatenate([bmu, bstd], axis=0)    # (2A, 1)
    return {"w1": w1, "b1": b1, "wh": wh, "bh": bh}


if __name__ == "__main__":
    # Shapes consistent with the module: state_dim=16, hidden=32, action_dim=4.
    # B=200 is deliberately NOT a multiple of the 128-row batch tile so both
    # the padding path and the 2-step batch grid (weight residency) are
    # exercised.
    B, STATE_DIM, HIDDEN_DIM, ACTION_DIM = 200, 16, 32, 4

    key = jax.random.PRNGKey(0)
    k_x, k_p = jax.random.split(key)
    states = jax.random.normal(k_x, (B, STATE_DIM), jnp.float32)
    params = init_params(k_p, STATE_DIM, HIDDEN_DIM, ACTION_DIM)

    fwd = jax.jit(functools.partial(policy_net_continuous, tb=128))
    mu, std = fwd(states, params)
    jax.block_until_ready((mu, std))

    # Pure-JAX reference of the same math (PyTorch-layout params).
    h_ref = jnp.maximum(states @ params["w1"].T + params["b1"].T, 0.0)
    z_ref = h_ref @ params["wh"].T + params["bh"].T
    mu_ref = 2.0 * jnp.tanh(z_ref[:, :ACTION_DIM])
    std_ref = jax.nn.softplus(z_ref[:, ACTION_DIM:])
    assert mu.shape == (B, ACTION_DIM) and std.shape == (B, ACTION_DIM)
    assert jnp.allclose(mu, mu_ref, atol=1e-5), "mu mismatch"
    assert jnp.allclose(std, std_ref, atol=1e-5), "std mismatch"

    print("KERNEL_OK")
</pallas_src>

<mosaic_0001>
module attributes {stable_mosaic.version = 11 : i64} {
  func.func @_policy_kernel(%arg0: i32, %arg1: memref<16x128xf32, #tpu.memory_space<vmem>>, %arg2: memref<32x16xf32, #tpu.memory_space<vmem>>, %arg3: memref<32x1xf32, #tpu.memory_space<vmem>>, %arg4: memref<8x32xf32, #tpu.memory_space<vmem>>, %arg5: memref<8x1xf32, #tpu.memory_space<vmem>>, %arg6: memref<8x128xf32, #tpu.memory_space<vmem>>) attributes {dimension_semantics = [#tpu.dimension_semantics<parallel>], iteration_bounds = array<i64: 2>, scalar_prefetch = 0 : i64, scratch_operands = 0 : i64, tpu.core_type = #tpu.core_type<tc>, window_params = [{transform_indices = @transform_0, window_bounds = array<i64: 16, 128>}, {pipeline_mode = #tpu.pipeline_mode<synchronous>, transform_indices = @transform_1, window_bounds = array<i64: 32, 16>}, {pipeline_mode = #tpu.pipeline_mode<synchronous>, transform_indices = @transform_2, window_bounds = array<i64: 32, 1>}, {pipeline_mode = #tpu.pipeline_mode<synchronous>, transform_indices = @transform_3, window_bounds = array<i64: 8, 32>}, {pipeline_mode = #tpu.pipeline_mode<synchronous>, transform_indices = @transform_4, window_bounds = array<i64: 8, 1>}, {transform_indices = @transform_5, window_bounds = array<i64: 8, 128>}]} {
    %c0 = arith.constant 0 : index
    %c0_0 = arith.constant 0 : index
    %0 = vector.load %arg1[%c0, %c0_0] : memref<16x128xf32, #tpu.memory_space<vmem>>, vector<16x128xf32>
    %c0_1 = arith.constant 0 : index
    %c0_2 = arith.constant 0 : index
    %1 = vector.load %arg2[%c0_1, %c0_2] : memref<32x16xf32, #tpu.memory_space<vmem>>, vector<32x16xf32>
    %cst = arith.constant dense<0.000000e+00> : vector<32x128xf32>
    %2 = tpu.matmul %1, %0, %cst {dimension_numbers = #tpu.dot_dimension_numbers<[1], [0], [0], [1], [0, 0, 1, 1], [], []>} : vector<32x16xf32>, vector<16x128xf32>, vector<32x128xf32> -> vector<32x128xf32>
    %c0_3 = arith.constant 0 : index
    %c0_4 = arith.constant 0 : index
    %3 = vector.load %arg3[%c0_3, %c0_4] : memref<32x1xf32, #tpu.memory_space<vmem>>, vector<32x1xf32>
    %4 = vector.broadcast %3 : vector<32x1xf32> to vector<32x128xf32>
    %5 = arith.addf %2, %4 : vector<32x128xf32>
    %cst_5 = arith.constant 0.000000e+00 : f32
    %6 = vector.broadcast %cst_5 : f32 to vector<32x128xf32>
    %7 = arith.maximumf %5, %6 : vector<32x128xf32>
    %c0_6 = arith.constant 0 : index
    %c0_7 = arith.constant 0 : index
    %8 = vector.load %arg4[%c0_6, %c0_7] : memref<8x32xf32, #tpu.memory_space<vmem>>, vector<8x32xf32>
    %cst_8 = arith.constant dense<0.000000e+00> : vector<8x128xf32>
    %9 = tpu.matmul %8, %7, %cst_8 {dimension_numbers = #tpu.dot_dimension_numbers<[1], [0], [0], [1], [0, 0, 1, 1], [], []>} : vector<8x32xf32>, vector<32x128xf32>, vector<8x128xf32> -> vector<8x128xf32>
    %c0_9 = arith.constant 0 : index
    %c0_10 = arith.constant 0 : index
    %10 = vector.load %arg5[%c0_9, %c0_10] : memref<8x1xf32, #tpu.memory_space<vmem>>, vector<8x1xf32>
    %11 = vector.broadcast %10 : vector<8x1xf32> to vector<8x128xf32>
    %12 = arith.addf %9, %11 : vector<8x128xf32>
    %13 = math.tanh %12 : vector<8x128xf32>
    %cst_11 = arith.constant 2.000000e+00 : f32
    %14 = vector.broadcast %cst_11 : f32 to vector<8x128xf32>
    %15 = arith.mulf %14, %13 : vector<8x128xf32>
    %cst_12 = arith.constant 0.000000e+00 : f32
    %16 = vector.broadcast %cst_12 : f32 to vector<8x128xf32>
    %17 = arith.maximumf %12, %16 : vector<8x128xf32>
    %18 = vector.broadcast %cst_12 : f32 to vector<8x128xf32>
    %19 = arith.subf %12, %18 : vector<8x128xf32>
    %20 = arith.cmpf one, %19, %19 : vector<8x128xf32>
    %21 = vector.broadcast %cst_12 : f32 to vector<8x128xf32>
    %22 = arith.addf %12, %21 : vector<8x128xf32>
    %23 = math.absf %19 : vector<8x128xf32>
    %cst_13 = arith.constant 0.000000e+00 : f32
    %24 = vector.broadcast %cst_13 : f32 to vector<8x128xf32>
    %25 = arith.subf %24, %23 : vector<8x128xf32>
    %26 = math.exp %25 : vector<8x128xf32>
    %27 = math.log1p %26 : vector<8x128xf32>
    %28 = arith.addf %17, %27 : vector<8x128xf32>
    %29 = arith.select %20, %22, %28 : vector<8x128xi1>, vector<8x128xf32>
    %30 = tpu.iota {dimensions = array<i32: 0>} : vector<8x128xi32>
    %c4_i32 = arith.constant 4 : i32
    %31 = vector.broadcast %c4_i32 : i32 to vector<8x128xi32>
    %32 = arith.cmpi slt, %30, %31 : vector<8x128xi32>
    %33 = arith.select %32, %15, %29 : vector<8x128xi1>, vector<8x128xf32>
    %c0_14 = arith.constant 0 : index
    %c0_15 = arith.constant 0 : index
    %34 = vector.load %arg6[%c0_14, %c0_15] : memref<8x128xf32, #tpu.memory_space<vmem>>, vector<8x128xf32>
    tpu.vector_store %arg6[%c0_14, %c0_15], %33 {strides = array<i32>} : memref<8x128xf32, #tpu.memory_space<vmem>>, vector<8x128xf32>,
    return
  }
  func.func @transform_0(%arg0: i32) -> (i32, i32) {
    %c0_i32 = arith.constant 0 : i32
    %c0_i32_0 = arith.constant 0 : i32
    return %c0_i32, %arg0 : i32, i32
  }
  func.func @transform_1(%arg0: i32) -> (i32, i32) {
    %c0_i32 = arith.constant 0 : i32
    %c0_i32_0 = arith.constant 0 : i32
    %c0_i32_1 = arith.constant 0 : i32
    return %c0_i32, %c0_i32_0 : i32, i32
  }
  func.func @transform_2(%arg0: i32) -> (i32, i32) {
    %c0_i32 = arith.constant 0 : i32
    %c0_i32_0 = arith.constant 0 : i32
    %c0_i32_1 = arith.constant 0 : i32
    return %c0_i32, %c0_i32_0 : i32, i32
  }
  func.func @transform_3(%arg0: i32) -> (i32, i32) {
    %c0_i32 = arith.constant 0 : i32
    %c0_i32_0 = arith.constant 0 : i32
    %c0_i32_1 = arith.constant 0 : i32
    return %c0_i32, %c0_i32_0 : i32, i32
  }
  func.func @transform_4(%arg0: i32) -> (i32, i32) {
    %c0_i32 = arith.constant 0 : i32
    %c0_i32_0 = arith.constant 0 : i32
    %c0_i32_1 = arith.constant 0 : i32
    return %c0_i32, %c0_i32_0 : i32, i32
  }
  func.func @transform_5(%arg0: i32) -> (i32, i32) {
    %c0_i32 = arith.constant 0 : i32
    %c0_i32_0 = arith.constant 0 : i32
    return %c0_i32, %arg0 : i32, i32
  }
}

</mosaic_0001>

<llo_original>
// kernel: policy_net_continuous.1
$region0: #{policy_net_continuous.1}
  #allocation0 [shape = 'u32[]', space=smem, size = 0x4, offset = 0x4, fixed_abs, tag = 'smem constant byte address 0x4 - core index']
  #allocation1 [shape = 'u32[144,128]{1,0:T(1,128)}', space=vmem, size = 0x12000, scoped, tag = 'internal scratch']
  %s0 = inlined_call_operand.vmem [shape: f32[16,256], index: 0, kind: input, shape index: {}]
  %s1 = inlined_call_operand.vmem [shape: f32[32,16], index: 1, kind: input, shape index: {}]
  %s2 = inlined_call_operand.vmem [shape: f32[32,1], index: 2, kind: input, shape index: {}]
  %s3 = inlined_call_operand.vmem [shape: f32[8,32], index: 3, kind: input, shape index: {}]
  %s4 = inlined_call_operand.vmem [shape: f32[8,1], index: 4, kind: input, shape index: {}]
  %s5 = inlined_call_operand.vmem [shape: f32[8,256], index: 5, kind: output, shape index: {}]
  %s6 = sld [smem:[#allocation0]]
  $region91: #{policy_net_continuous.1} parent=0
    _
  %s8 = ssub.s32 1, %s6
  %s9 = scalar_select 0, %s8, %s6
  $region1: #{policy_net_continuous.1} parent=0
    #allocation2 [shape = 'u8[16384]{0}', space=vmem, size = 0x4000, scoped, tag = 'input window, operand 0']
    loop: start=0, step=1, limit=4
    $region2: #{policy_net_continuous.1} parent=1 // loop_pre_header
      _
    $region3: #{policy_net_continuous.1} parent=1 // loop_header
      %s11 = sphi 0, %s15
      %p12 = scmp.ge.s32.totalorder %s11, 4
      %s21 = sphi 0, %s23
      %s24 = sphi 0, %s21
      %s25 = sphi 0, %s24
      %s41 = sphi 0, %s25
      %s45 = sphi 0, %s45
      %s47 = sphi 0, %s45
      %s48 = sphi 0, %s47
      %s62 = sphi 0, %s48
      %s66 = sphi 0, %s66
      %s68 = sphi 0, %s66
      %s69 = sphi 0, %s68
      %s83 = sphi 0, %s69
      %s87 = sphi 0, %s87
      %s89 = sphi 0, %s87
      %s90 = sphi 0, %s89
      %s104 = sphi 0, %s90
      %s108 = sphi 0, %s108
      %s110 = sphi 0, %s108
      %s111 = sphi 0, %s110
      %s125 = sphi 0, %s111
      %s131 = sphi 0, %s133
      %s134 = sphi 0, %s131
      %s135 = sphi 0, %s134
      %s151 = sphi 0, %s135
    $region4: #{policy_net_continuous.1} parent=1 // loop_header_branch
      %14 = sbr.rel (%p12) target = $region8
    $region5: #{policy_net_continuous.1} parent=1 // loop_body
      %s16 = ssub.s32 %s11, 1
      %s17 = ssub.s32 %s11, 2
      %s18 = sadd.s32 %s11, 1
      %s19 = ssub.s32 %s11, %s18
      %p20 = scmp.eq.s32.totalorder %s19, 0
      %s22 = sadd.s32 %s21, 1
      %s23 = scalar_select %p20, %s21, %s22
      %p26 = pneg %p20
      %p27 = scmp.eq.s32.totalorder %s11, 1
      %p28 = por %p26, %p27
      %p29 = scmp.ne.s32.totalorder %s21, %s24
      %p30 = scmp.eq.s32.totalorder %s11, 0
      %p31 = por %p29, %p30
      %p32 = scmp.ne.s32.totalorder %s21, %s24
      %p33 = scmp.eq.s32.totalorder %s16, 1
      %p34 = por %p32, %p33
      %p35 = scmp.ne.s32.totalorder %s24, %s25
      %p36 = scmp.eq.s32.totalorder %s16, 0
      %p37 = por %p35, %p36
      %p38 = scmp.ne.s32.totalorder %s24, %s25
      %p39 = scmp.eq.s32.totalorder %s17, 1
      %p40 = por %p38, %p39
      %p42 = scmp.ne.s32.totalorder %s25, %s41
      %p43 = scmp.eq.s32.totalorder %s17, 0
      %p44 = por %p42, %p43
      %s46 = sadd.s32 %s45, 1
      %p49 = scmp.eq.s32.totalorder %s11, 1
      %p50 = scmp.ne.s32.totalorder %s45, %s47
      %p51 = scmp.eq.s32.totalorder %s11, 0
      %p52 = por %p50, %p51
      %p53 = scmp.ne.s32.totalorder %s45, %s47
      %p54 = scmp.eq.s32.totalorder %s16, 1
      %p55 = por %p53, %p54
      %p56 = scmp.ne.s32.totalorder %s47, %s48
      %p57 = scmp.eq.s32.totalorder %s16, 0
      %p58 = por %p56, %p57
      %p59 = scmp.ne.s32.totalorder %s47, %s48
      %p60 = scmp.eq.s32.totalorder %s17, 1
      %p61 = por %p59, %p60
      %p63 = scmp.ne.s32.totalorder %s48, %s62
      %p64 = scmp.eq.s32.totalorder %s17, 0
      %p65 = por %p63, %p64
      %s67 = sadd.s32 %s66, 1
      %p70 = scmp.eq.s32.totalorder %s11, 1
      %p71 = scmp.ne.s32.totalorder %s66, %s68
      %p72 = scmp.eq.s32.totalorder %s11, 0
      %p73 = por %p71, %p72
      %p74 = scmp.ne.s32.totalorder %s66, %s68
      %p75 = scmp.eq.s32.totalorder %s16, 1
      %p76 = por %p74, %p75
      %p77 = scmp.ne.s32.totalorder %s68, %s69
      %p78 = scmp.eq.s32.totalorder %s16, 0
      %p79 = por %p77, %p78
      %p80 = scmp.ne.s32.totalorder %s68, %s69
      %p81 = scmp.eq.s32.totalorder %s17, 1
      %p82 = por %p80, %p81
      %p84 = scmp.ne.s32.totalorder %s69, %s83
      %p85 = scmp.eq.s32.totalorder %s17, 0
      %p86 = por %p84, %p85
      %s88 = sadd.s32 %s87, 1
      %p91 = scmp.eq.s32.totalorder %s11, 1
      %p92 = scmp.ne.s32.totalorder %s87, %s89
      %p93 = scmp.eq.s32.totalorder %s11, 0
      %p94 = por %p92, %p93
      %p95 = scmp.ne.s32.totalorder %s87, %s89
      %p96 = scmp.eq.s32.totalorder %s16, 1
      %p97 = por %p95, %p96
      %p98 = scmp.ne.s32.totalorder %s89, %s90
      %p99 = scmp.eq.s32.totalorder %s16, 0
      %p100 = por %p98, %p99
      %p101 = scmp.ne.s32.totalorder %s89, %s90
      %p102 = scmp.eq.s32.totalorder %s17, 1
      %p103 = por %p101, %p102
      %p105 = scmp.ne.s32.totalorder %s90, %s104
      %p106 = scmp.eq.s32.totalorder %s17, 0
      %p107 = por %p105, %p106
      %s109 = sadd.s32 %s108, 1
      %p112 = scmp.eq.s32.totalorder %s11, 1
      %p113 = scmp.ne.s32.totalorder %s108, %s110
      %p114 = scmp.eq.s32.totalorder %s11, 0
      %p115 = por %p113, %p114
      %p116 = scmp.ne.s32.totalorder %s108, %s110
      %p117 = scmp.eq.s32.totalorder %s16, 1
      %p118 = por %p116, %p117
      %p119 = scmp.ne.s32.totalorder %s110, %s111
      %p120 = scmp.eq.s32.totalorder %s16, 0
      %p121 = por %p119, %p120
      %p122 = scmp.ne.s32.totalorder %s110, %s111
      %p123 = scmp.eq.s32.totalorder %s17, 1
      %p124 = por %p122, %p123
      %p126 = scmp.ne.s32.totalorder %s111, %s125
      %p127 = scmp.eq.s32.totalorder %s17, 0
      %p128 = por %p126, %p127
      %s129 = ssub.s32 %s11, %s18
      %p130 = scmp.eq.s32.totalorder %s129, 0
      %s132 = sadd.s32 %s131, 1
      %s133 = scalar_select %p130, %s131, %s132
      %p136 = pneg %p130
      %p137 = scmp.eq.s32.totalorder %s11, 1
      %p138 = por %p136, %p137
      %p139 = scmp.ne.s32.totalorder %s131, %s134
      %p140 = scmp.eq.s32.totalorder %s11, 0
      %p141 = por %p139, %p140
      %p142 = scmp.ne.s32.totalorder %s131, %s134
      %p143 = scmp.eq.s32.totalorder %s16, 1
      %p144 = por %p142, %p143
      %p145 = scmp.ne.s32.totalorder %s134, %s135
      %p146 = scmp.eq.s32.totalorder %s16, 0
      %p147 = por %p145, %p146
      %p148 = scmp.ne.s32.totalorder %s134, %s135
      %p149 = scmp.eq.s32.totalorder %s17, 1
      %p150 = por %p148, %p149
      %p152 = scmp.ne.s32.totalorder %s135, %s151
      %p153 = scmp.eq.s32.totalorder %s17, 0
      %p154 = por %p152, %p153
      %p155 = scmp.le.s32.totalorder 1, %s11
      %p156 = scmp.lt.s32.totalorder %s11, 3
      %p157 = pnand %p155, %p156
      %p158 = pneg %p157
      // Predicated region
      $region9: #{policy_net_continuous.1} parent=5 // pred_check
        _
      $region10: #{policy_net_continuous.1} parent=5 // pred_check_branch
        %160 = sbr.rel (%p157) target = $region12
      $region11: #{policy_net_continuous.1} parent=5 // pred_region
        %s161 = ssub.s32 %s11, 1
        // Predicated region
        $region13: #{policy_net_continuous.1} parent=11 // pred_check
          %p162 = pneg %p58
        $region14: #{policy_net_continuous.1} parent=11 // pred_check_branch
          %164 = sbr.rel (%p162) target = $region16
        $region15: #{policy_net_continuous.1} parent=11 // pred_region
          _
        $region16: #{policy_net_continuous.1} parent=11 // pred_fallthru
          _
        // Predicated region
        $region17: #{policy_net_continuous.1} parent=11 // pred_check
          %p165 = pneg %p79
        $region18: #{policy_net_continuous.1} parent=11 // pred_check_branch
          %167 = sbr.rel (%p165) target = $region20
        $region19: #{policy_net_continuous.1} parent=11 // pred_region
          _
        $region20: #{policy_net_continuous.1} parent=11 // pred_fallthru
          _
        // Predicated region
        $region21: #{policy_net_continuous.1} parent=11 // pred_check
          %p168 = pneg %p100
        $region22: #{policy_net_continuous.1} parent=11 // pred_check_branch
          %170 = sbr.rel (%p168) target = $region24
        $region23: #{policy_net_continuous.1} parent=11 // pred_region
          _
        $region24: #{policy_net_continuous.1} parent=11 // pred_fallthru
          _
        // Predicated region
        $region25: #{policy_net_continuous.1} parent=11 // pred_check
          %p171 = pneg %p121
        $region26: #{policy_net_continuous.1} parent=11 // pred_check_branch
          %173 = sbr.rel (%p171) target = $region28
        $region27: #{policy_net_continuous.1} parent=11 // pred_region
          _
        $region28: #{policy_net_continuous.1} parent=11 // pred_fallthru
          _
      $region12: #{policy_net_continuous.1} parent=5 // pred_fallthru
        _
      %p174 = scmp.lt.s32.totalorder %s11, 2
      // Predicated region
      $region29: #{policy_net_continuous.1} parent=5 // pred_check
        %p175 = pneg %p174
      $region30: #{policy_net_continuous.1} parent=5 // pred_check_branch
        %177 = sbr.rel (%p175) target = $region32
      $region31: #{policy_net_continuous.1} parent=5 // pred_region
        // Predicated region
        $region33: #{policy_net_continuous.1} parent=31 // pred_check
          %p178 = pneg %p31
        $region34: #{policy_net_continuous.1} parent=31 // pred_check_branch
          %180 = sbr.rel (%p178) target = $region36
        $region35: #{policy_net_continuous.1} parent=31 // pred_region
          %s181 = sand.u32 %s21, 1
          %s182 = sand.u32 %s21, 1
          %s183 = smul.addr %s182, 16
          %s184 = scalar_lea.vmem [#allocation2], %s183
          %s185 = smul.addr %s11, 8
          %s186 = scalar_lea.vmem %s0, %s185
          // Predicated region
          $region37: #{policy_net_continuous.1} parent=35 // pred_check
            _
          $region38: #{policy_net_continuous.1} parent=35 // pred_check_branch
            %188 = sbr.rel (0) target = $region40
          $region39: #{policy_net_continuous.1} parent=35 // pred_region
            // Predicated region
            $region41: #{policy_net_continuous.1} parent=39 // pred_check
              _
            $region42: #{policy_net_continuous.1} parent=39 // pred_check_branch
              %190 = sbr.rel (0) target = $region44
            $region43: #{policy_net_continuous.1} parent=39 // pred_region
              // Predicated region
              $region56: #{policy_net_continuous.1} parent=43 // pred_check
                _
              $region57: #{policy_net_continuous.1} parent=43 // pred_check_branch
                %208 = sbr.rel (0) target = $region59
              $region58: #{policy_net_continuous.1} parent=43 // pred_region
                loop: start=0, step=1, limit=1
                $region60: #{policy_net_continuous.1} parent=58 // loop_pre_header
                  _
                $region61: #{policy_net_continuous.1} parent=58 // loop_header
                  %s210 = sphi 0, %s214
                  %p211 = scmp.ge.s32.totalorder %s210, 1
                  %s215 = sphi %s186, %s186
                  %s216 = sphi %s184, %s184
                $region62: #{policy_net_continuous.1} parent=58 // loop_header_branch
                  %213 = sbr.rel (%p211) target = $region66
                $region63: #{policy_net_continuous.1} parent=58 // loop_body
                  %v217 = vld [vmem:[%s215] sm:$0xff]
                  %218 = vst [vmem:[%s216] sm:$0xff] %v217
                  %v219 = vld [vmem:[%s215 + $0x10] sm:$0xff]
                  %220 = vst [vmem:[%s216 + $0x8] sm:$0xff] %v219
                $region64: #{policy_net_continuous.1} parent=58 // loop_footer
                  %s214 = sadd.s32 1, %s210
                $region65: #{policy_net_continuous.1} parent=58 // loop_footer_branch
                  %209 = sbr.rel target = $region61
                $region66: #{policy_net_continuous.1} parent=58 // loop_exit
                  _
              $region59: #{policy_net_continuous.1} parent=43 // pred_fallthru
                _
              // Predicated region
              $region67: #{policy_net_continuous.1} parent=43 // pred_check
                _
              $region68: #{policy_net_continuous.1} parent=43 // pred_check_branch
                %222 = sbr.rel target = $region70
              $region69: #{policy_net_continuous.1} parent=43 // pred_region
                _
              $region70: #{policy_net_continuous.1} parent=43 // pred_fallthru
                _
            $region44: #{policy_net_continuous.1} parent=39 // pred_fallthru
              _
            // Predicated region
            $region45: #{policy_net_continuous.1} parent=39 // pred_check
              _
            $region46: #{policy_net_continuous.1} parent=39 // pred_check_branch
              %192 = sbr.rel target = $region48
            $region47: #{policy_net_continuous.1} parent=39 // pred_region
              %s194 = ssub.s32 256, 1
              loop: start=0, step=1, limit=1
              $region49: #{policy_net_continuous.1} parent=47 // loop_pre_header
                _
              $region50: #{policy_net_continuous.1} parent=47 // loop_header
                %s196 = sphi 0, %s200
                %p197 = scmp.ge.s32.totalorder %s196, 1
                %s201 = sphi %s186, %s186
                %s202 = sphi %s184, %s184
              $region51: #{policy_net_continuous.1} parent=47 // loop_header_branch
                %199 = sbr.rel (%p197) target = $region55
              $region52: #{policy_net_continuous.1} parent=47 // loop_body
                %v203 = vld [vmem:[%s201] sm:%s194]
                %204 = vst [vmem:[%s202] sm:%s194] %v203
                %v205 = vld [vmem:[%s201 + $0x10] sm:%s194]
                %206 = vst [vmem:[%s202 + $0x8] sm:%s194] %v205
              $region53: #{policy_net_continuous.1} parent=47 // loop_footer
                %s200 = sadd.s32 1, %s196
              $region54: #{policy_net_continuous.1} parent=47 // loop_footer_branch
                %195 = sbr.rel target = $region50
              $region55: #{policy_net_continuous.1} parent=47 // loop_exit
                _
            $region48: #{policy_net_continuous.1} parent=39 // pred_fallthru
              _
          $region40: #{policy_net_continuous.1} parent=35 // pred_fallthru
            _
          %223 = vnop
        $region36: #{policy_net_continuous.1} parent=31 // pred_fallthru
          _
      $region32: #{policy_net_continuous.1} parent=5 // pred_fallthru
        _
      %p224 = scmp.le.s32.totalorder 1, %s11
      %p225 = scmp.lt.s32.totalorder %s11, 3
      %p226 = pnand %p224, %p225
      %p227 = pneg %p226
      // Predicated region
      $region71: #{policy_net_continuous.1} parent=5 // pred_check
        _
      $region72: #{policy_net_continuous.1} parent=5 // pred_check_branch
        %229 = sbr.rel (%p226) target = $region74
      $region73: #{policy_net_continuous.1} parent=5 // pred_region
        %s230 = ssub.s32 %s11, 1
        %s231 = sand.u32 %s24, 1
        %s232 = sand.u32 %s24, 1
        %s233 = smul.addr %s232, 16
        %s234 = scalar_lea.vmem [#allocation2], %s233
        // Predicated region
        $region75: #{policy_net_continuous.1} parent=73 // pred_check
          %p235 = pneg %p37
        $region76: #{policy_net_continuous.1} parent=73 // pred_check_branch
          %237 = sbr.rel (%p235) target = $region78
        $region77: #{policy_net_continuous.1} parent=73 // pred_region
          _
        $region78: #{policy_net_continuous.1} parent=73 // pred_fallthru
          _
        %s238 = sand.u32 %s24, 1
        %s239 = sand.u32 %s24, 1
        %s240 = smul.addr %s239, 16
        %s241 = scalar_lea.vmem [#allocation2], %s240
        %p242 = pneg %p37
        %p243 = pneg %p34
        %p244 = pneg %p58
        %p245 = pneg %p55
        %p246 = pneg %p79
        %p247 = pneg %p76
        %p248 = pneg %p100
        %p249 = pneg %p97
        %p250 = pneg %p121
        %p251 = pneg %p118
        %p252 = pneg %p147
        %p253 = pneg %p144
        %p254 = scmp.lt.s32.totalorder %s16, 1
        %s255 = scalar_select %p254, %s16, 1
        %s256 = smul.addr %s255, 8
        %s257 = scalar_lea.vmem %s5, %s256
        %p258 = scmp.lt.s32.totalorder %s16, 1
        %s259 = scalar_select %p258, %s16, 1
        %s260 = smul.addr %s259, 8
        %s261 = scalar_lea.vmem %s5, %s260
        %v262 = vld [vmem:[%s234] sm:$0xff]
        %v263 = vld [vmem:[%s234 + $0x8] sm:$0xff]
        %v264 = vld [vmem:[%s1] sm:$0xff]
        %v265 = vld [vmem:[%s1 + $0x8] sm:$0xff]
        %v266 = vld [vmem:[%s1 + $0x10] sm:$0xff]
        %v267 = vld [vmem:[%s1 + $0x18] sm:$0xff]
        %v268 = vld [vmem:[%s2] sm:$0xff]
        %v269 = vld [vmem:[%s2 + $0x8] sm:$0xff]
        %v270 = vld [vmem:[%s2 + $0x10] sm:$0xff]
        %v271 = vld [vmem:[%s2 + $0x18] sm:$0xff]
        %273 = vset.pattern.permute.xlu0 0
        %274 = vperm.xlu0 %273, %v268
        %v275 = vpop.permute.xlu0 %274
        %278 = vset.pattern.permute.xlu0 0
        %279 = vperm.xlu0 %278, %v269
        %v280 = vpop.permute.xlu0 %279
        %283 = vset.pattern.permute.xlu0 0
        %284 = vperm.xlu0 %283, %v270
        %v285 = vpop.permute.xlu0 %284
        %288 = vset.pattern.permute.xlu0 0
        %289 = vperm.xlu0 %288, %v271
        %v290 = vpop.permute.xlu0 %289
        %vm292 = vcmask 130048
        %v294 = vsel %vm292, %v264, 0
        %v297 = vsel %vm292, %v265, 0
        %v300 = vsel %vm292, %v266, 0
        %v303 = vsel %vm292, %v267, 0
        %305 = vmatprep.subr.mxu0 0.0
        %306 = vmatpush1.msra.mxu0 0.0
        %307 = vmatprep.subr.mxu0 0.0
        %308 = vmatpush1.msra.mxu0 0.0
        %309 = vmatprep.subr.mxu0 0.0
        %310 = vmatpush1.msra.mxu0 0.0
        %311 = vmatprep.subr.mxu0 0.0
        %312 = vmatpush1.msra.mxu0 0.0
        %313 = vmatprep.subr.mxu0 0.0
        %314 = vmatpush1.msra.mxu0 0.0
        %315 = vmatprep.subr.mxu0 0.0
        %316 = vmatpush1.msra.mxu0 0.0
        %317 = vmatprep.subr.mxu0 0.0
        %318 = vmatpush1.msra.mxu0 0.0
        %319 = vmatprep.subr.mxu0 0.0
        %320 = vmatpush1.msra.mxu0 0.0
        %321 = vmatprep.subr.mxu0 0.0
        %322 = vmatpush1.msra.mxu0 0.0
        %323 = vmatprep.subr.mxu0 0.0
        %324 = vmatpush1.msra.mxu0 0.0
        %325 = vmatprep.subr.mxu0 0.0
        %326 = vmatpush1.msra.mxu0 0.0
        %327 = vmatprep.subr.mxu0 0.0
        %328 = vmatpush1.msra.mxu0 0.0
        %329 = vmatprep.subr.mxu0 0.0
        %330 = vmatpush1.msra.mxu0 0.0
        %331 = vmatprep.subr.mxu0 0.0
        %332 = vmatpush1.msra.mxu0 0.0
        %333 = vmatprep.subr.mxu0 0.0
        %334 = vmatpush1.msra.mxu0 %v263
        %335 = vmatprep.subr.mxu0 0.0
        %336 = vmatpush1.msra.mxu0 %v262
        %337 = vmatprep.subr.mxu0 0.0
        %338 = vmatpush2.msra.mxu0 0.0
        %339 = vmatprep.subr.mxu0 0.0
        %340 = vmatpush2.msra.mxu0 0.0
        %341 = vmatprep.subr.mxu0 0.0
        %342 = vmatpush2.msra.mxu0 0.0
        %343 = vmatprep.subr.mxu0 0.0
        %344 = vmatpush2.msra.mxu0 0.0
        %345 = vmatprep.subr.mxu0 0.0
        %346 = vmatpush2.msra.mxu0 0.0
        %347 = vmatprep.subr.mxu0 0.0
        %348 = vmatpush2.msra.mxu0 0.0
        %349 = vmatprep.subr.mxu0 0.0
        %350 = vmatpush2.msra.mxu0 0.0
        %351 = vmatprep.subr.mxu0 0.0
        %352 = vmatpush2.msra.mxu0 0.0
        %353 = vmatprep.subr.mxu0 0.0
        %354 = vmatpush2.msra.mxu0 0.0
        %355 = vmatprep.subr.mxu0 0.0
        %356 = vmatpush2.msra.mxu0 0.0
        %357 = vmatprep.subr.mxu0 0.0
        %358 = vmatpush2.msra.mxu0 0.0
        %359 = vmatprep.subr.mxu0 0.0
        %360 = vmatpush2.msra.mxu0 0.0
        %361 = vmatprep.subr.mxu0 0.0
        %362 = vmatpush2.msra.mxu0 0.0
        %363 = vmatprep.subr.mxu0 0.0
        %364 = vmatpush2.msra.mxu0 0.0
        %365 = vmatprep.subr.mxu0 0.0
        %366 = vmatpush2.msra.mxu0 0.0
        %367 = vmatprep.subr.mxu0 0.0
        %368 = vmatpush2.msra.mxu0 0.0
        %369 = vmatprep.mubr.f32.mxu0 0.0
        %370 = vmatmul.mubr.f32.gmra.mxu0 %v294
        %v371 = vpop.f32.mrf.mxu0
        %v372 = vadd.f32 %v275, %v371
        %v373 = vpop.f32.mrf.mxu0
        %374 = vmatprep.mubr.f32.mxu0 0.0
        %375 = vmatmul.mubr.f32.gmra.mxu0 %v297
        %v376 = vpop.f32.mrf.mxu0
        %v377 = vadd.f32 %v280, %v376
        %v378 = vpop.f32.mrf.mxu0
        %379 = vmatprep.mubr.f32.mxu0 0.0
        %380 = vmatmul.mubr.f32.gmra.mxu0 %v300
        %v381 = vpop.f32.mrf.mxu0
        %v382 = vadd.f32 %v285, %v381
        %v383 = vpop.f32.mrf.mxu0
        %384 = vmatprep.mubr.f32.mxu0 0.0
        %385 = vmatmul.mubr.f32.gmra.mxu0 %v303
        %v386 = vpop.f32.mrf.mxu0
        %v387 = vadd.f32 %v290, %v386
        %v388 = vpop.f32.mrf.mxu0
        %389 = vdwg.mxu0
        %v390 = vmax.f32 %v372, 0.0
        %v391 = vmax.f32 %v377, 0.0
        %v392 = vmax.f32 %v382, 0.0
        %v393 = vmax.f32 %v387, 0.0
        %v394 = vld [vmem:[%s3] sm:$0xff]
        %v395 = vld [vmem:[%s4] sm:$0xff]
        %397 = vset.pattern.permute.xlu0 0
        %398 = vperm.xlu0 %397, %v395
        %v399 = vpop.permute.xlu0 %398
        %vm401 = vcmask 261120
        %v403 = vsel %vm401, %v394, 0
        %405 = vmatprep.subr.mxu0 0.0
        %406 = vmatpush1.msra.mxu0 0.0
        %407 = vmatprep.subr.mxu0 0.0
        %408 = vmatpush1.msra.mxu0 0.0
        %409 = vmatprep.subr.mxu0 0.0
        %410 = vmatpush1.msra.mxu0 0.0
        %411 = vmatprep.subr.mxu0 0.0
        %412 = vmatpush1.msra.mxu0 0.0
        %413 = vmatprep.subr.mxu0 0.0
        %414 = vmatpush1.msra.mxu0 0.0
        %415 = vmatprep.subr.mxu0 0.0
        %416 = vmatpush1.msra.mxu0 0.0
        %417 = vmatprep.subr.mxu0 0.0
        %418 = vmatpush1.msra.mxu0 0.0
        %419 = vmatprep.subr.mxu0 0.0
        %420 = vmatpush1.msra.mxu0 0.0
        %421 = vmatprep.subr.mxu0 0.0
        %422 = vmatpush1.msra.mxu0 0.0
        %423 = vmatprep.subr.mxu0 0.0
        %424 = vmatpush1.msra.mxu0 0.0
        %425 = vmatprep.subr.mxu0 0.0
        %426 = vmatpush1.msra.mxu0 0.0
        %427 = vmatprep.subr.mxu0 0.0
        %428 = vmatpush1.msra.mxu0 0.0
        %429 = vmatprep.subr.mxu0 0.0
        %430 = vmatpush1.msra.mxu0 %v393
        %431 = vmatprep.subr.mxu0 0.0
        %432 = vmatpush1.msra.mxu0 %v392
        %433 = vmatprep.subr.mxu0 0.0
        %434 = vmatpush1.msra.mxu0 %v391
        %435 = vmatprep.subr.mxu0 0.0
        %436 = vmatpush1.msra.mxu0 %v390
        %437 = vmatprep.subr.mxu0 0.0
        %438 = vmatpush2.msra.mxu0 0.0
        %439 = vmatprep.subr.mxu0 0.0
        %440 = vmatpush2.msra.mxu0 0.0
        %441 = vmatprep.subr.mxu0 0.0
        %442 = vmatpush2.msra.mxu0 0.0
        %443 = vmatprep.subr.mxu0 0.0
        %444 = vmatpush2.msra.mxu0 0.0
        %445 = vmatprep.subr.mxu0 0.0
        %446 = vmatpush2.msra.mxu0 0.0
        %447 = vmatprep.subr.mxu0 0.0
        %448 = vmatpush2.msra.mxu0 0.0
        %449 = vmatprep.subr.mxu0 0.0
        %450 = vmatpush2.msra.mxu0 0.0
        %451 = vmatprep.subr.mxu0 0.0
        %452 = vmatpush2.msra.mxu0 0.0
        %453 = vmatprep.subr.mxu0 0.0
        %454 = vmatpush2.msra.mxu0 0.0
        %455 = vmatprep.subr.mxu0 0.0
        %456 = vmatpush2.msra.mxu0 0.0
        %457 = vmatprep.subr.mxu0 0.0
        %458 = vmatpush2.msra.mxu0 0.0
        %459 = vmatprep.subr.mxu0 0.0
        %460 = vmatpush2.msra.mxu0 0.0
        %461 = vmatprep.subr.mxu0 0.0
        %462 = vmatpush2.msra.mxu0 0.0
        %463 = vmatprep.subr.mxu0 0.0
        %464 = vmatpush2.msra.mxu0 0.0
        %465 = vmatprep.subr.mxu0 0.0
        %466 = vmatpush2.msra.mxu0 0.0
        %467 = vmatprep.subr.mxu0 0.0
        %468 = vmatpush2.msra.mxu0 0.0
        %469 = vmatprep.mubr.f32.mxu0 0.0
        %470 = vmatmul.mubr.f32.gmra.mxu0 %v403
        %v471 = vpop.f32.mrf.mxu0
        %v472 = vadd.f32 %v399, %v471
        %v473 = vpop.f32.mrf.mxu0
        %474 = vdwg.mxu0
        %v475 = vtanh.pop %v472
        %v476 = vmul.f32 %v475, 2.0
        %v477 = vmax.f32 %v472, 0.0
        %vm478 = vcmp.ne.f32.partialorder %v472, %v472
        %v479 = vadd.f32 %v472, 0.0
        %v480 = vand.u32 2147483647, %v472
        %v481 = vsub.f32 0.0, %v480
        %v482 = vmul.f32 %v481, 1.442695
        %v483 = vpow.pop %v482
        %v484 = vadd.f32 %v483, 1.0
        %v485 = vlog2.pop %v484
        %v486 = vmul.f32 %v485, 0.6931472
        %v487 = vmul.f32 -0.5, %v483
        %v488 = vadd.f32 %v487, 1.0
        %v489 = vmul.f32 %v488, %v483
        %v490 = vand.u32 2147483647, %v483
        %vm491 = vcmp.lt.f32.partialorder %v490, 0.0004427343
        %v492 = vsel %vm491, %v489, %v486
        %v493 = vadd.f32 %v477, %v492
        %v494 = vsel %vm478, %v479, %v493
        %v495 = vlaneseq
        %v496 = vshrl.u32 %v495, 7
        %vm497 = vcmp.lt.s32.totalorder %v496, 4
        %v498 = vsel %vm497, %v476, %v494
        %499 = vst [vmem:[%s261] sm:$0xff] %v498
        %p500 = scmp.lt.s32.totalorder %s16, 1
        %s501 = scalar_select %p500, %s16, 1
        %s502 = smul.addr %s501, 8
        %s503 = scalar_lea.vmem %s5, %s502
        // Predicated region
        $region79: #{policy_net_continuous.1} parent=73 // pred_check
          %p504 = pneg %p144
        $region80: #{policy_net_continuous.1} parent=73 // pred_check_branch
          %506 = sbr.rel (%p504) target = $region82
        $region81: #{policy_net_continuous.1} parent=73 // pred_region
          _
        $region82: #{policy_net_continuous.1} parent=73 // pred_fallthru
          _
      $region74: #{policy_net_continuous.1} parent=5 // pred_fallthru
        _
      %p507 = scmp.le.s32.totalorder 2, %s11
      // Predicated region
      $region83: #{policy_net_continuous.1} parent=5 // pred_check
        %p508 = pneg %p507
      $region84: #{policy_net_continuous.1} parent=5 // pred_check_branch
        %510 = sbr.rel (%p508) target = $region86
      $region85: #{policy_net_continuous.1} parent=5 // pred_region
        %s511 = ssub.s32 %s11, 2
        // Predicated region
        $region87: #{policy_net_continuous.1} parent=85 // pred_check
          %p512 = pneg %p150
        $region88: #{policy_net_continuous.1} parent=85 // pred_check_branch
          %514 = sbr.rel (%p512) target = $region90
        $region89: #{policy_net_continuous.1} parent=85 // pred_region
          %p515 = scmp.lt.s32.totalorder %s17, 1
          %s516 = scalar_select %p515, %s17, 1
          %s517 = smul.addr %s516, 8
          %s518 = scalar_lea.vmem %s5, %s517
        $region90: #{policy_net_continuous.1} parent=85 // pred_fallthru
          _
      $region86: #{policy_net_continuous.1} parent=5 // pred_fallthru
        _
    $region6: #{policy_net_continuous.1} parent=1 // loop_footer
      %s15 = sadd.s32 1, %s11
    $region7: #{policy_net_continuous.1} parent=1 // loop_footer_branch
      %10 = sbr.rel target = $region3
    $region8: #{policy_net_continuous.1} parent=1 // loop_exit
      _

</llo_original>
